<compile_context>
chip_gen: v7x
topology: tpu7x:2x2x1
jax: 0.10.0
libtpu: 0.0.40
codegen_flags: <defaults>
</compile_context>

<pallas_src>
import jax
import jax.numpy as jnp
from jax import lax
from jax.experimental import pallas as pl
from jax.experimental.pallas import tpu as pltpu

_MIB = 1024 * 1024
# Per-grid-step HBM target across the 3 inputs (~4 MiB keeps the fixed per-step
# overhead amortized and suits v7x's faster HBM as well).
_TARGET_STEP_BYTES = 4 * _MIB
# Cap on the double-buffered input footprint (3 inputs x 2 pipeline buffers).
_VMEM_INPUT_FOOTPRINT_CAP = 40 * _MIB
# Explicit scoped-VMEM limit (footprint + headroom); leaves >=16 MiB of the
# 64 MiB physical VMEM on v7x for Mosaic internal scratch.
_VMEM_LIMIT_CAP = 48 * _MIB


def _round_up(x: int, m: int) -> int:
    return ((x + m - 1) // m) * m


def _make_triplet_kernel(margin, eps, true_b, block_rows, sub_rows, d,
                         need_mask, use_mxu_reductions):
    # Plain Python scalars only: closing over jnp arrays would make them
    # captured consts, which pallas_call rejects.
    margin_f = float(margin)
    eps2 = float(eps) * float(eps)
    n_sub = block_rows // sub_rows

    def kernel(a_ref, p_ref, n_ref, o_ref):
        tile_row0 = pl.program_id(0) * block_rows

        if use_mxu_reductions:
            # Row reductions as (rows, D) @ (D, 1) matmuls: the MXU/vex slot is
            # idle in this kernel while the XLU would otherwise carry 5
            # cross-lane reduces per row group. Hoisted out of the sub-chunk
            # loop (JAX does not CSE broadcast_in_dim).
            ones_col = jnp.ones((d, 1), dtype=jnp.float32)

            def rowsum(x):
                return jnp.dot(x, ones_col, preferred_element_type=jnp.float32)
        else:
            def rowsum(x):
                return jnp.sum(x, axis=-1, keepdims=True)

        def chunk_partial(r0):
            # r0 = row offset of this sub-chunk inside the (block_rows, D) tile.
            a = a_ref[pl.ds(r0, sub_rows), :].astype(jnp.float32)
            p = p_ref[pl.ds(r0, sub_rows), :].astype(jnp.float32)
            n = n_ref[pl.ds(r0, sub_rows), :].astype(jnp.float32)

            sa = rowsum(a * a)
            sp = rowsum(p * p)
            sn = rowsum(n * n)
            pos_dot = rowsum(a * p)
            neg_dot = rowsum(a * n)

            # PyTorch cosine_similarity clamps the *product* of squared norms:
            # denom = sqrt(max(||x||^2 * ||y||^2, eps^2)). rsqrt -> EUP.
            pos_sim = pos_dot * lax.rsqrt(jnp.maximum(sa * sp, eps2))
            neg_sim = neg_dot * lax.rsqrt(jnp.maximum(sa * sn, eps2))
            losses = jnp.maximum(margin_f - pos_sim + neg_sim, 0.0)  # (sub, 1)

            if need_mask:
                # Padded rows hold undefined data; keep the SELECT form so any
                # NaN/Inf in the dead branch is dropped (never multiply-mask).
                rows = (tile_row0 + r0 +
                        lax.broadcasted_iota(jnp.int32, (sub_rows, 1), 0))
                losses = jnp.where(rows < true_b, losses, 0.0)

            return jnp.sum(losses, axis=0, keepdims=True)  # (1, 1)

        if n_sub == 1:
            total = chunk_partial(0)
        else:
            # Fixed-size sub-chunks keep live f32 intermediates small even
            # though the BlockSpec tile was enlarged for DMA amortization.
            def body(c, acc):
                r0 = pl.multiple_of(c * sub_rows, sub_rows)
                return acc + chunk_partial(r0)

            total = lax.fori_loop(0, n_sub, body,
                                  jnp.zeros((1, 1), jnp.float32))

        # Lane-dense (1, 128) output block (unmasked store); lane 0 carries the
        # per-tile partial sum, wrapper reads column 0. Each grid step owns a
        # distinct block so the axis stays "parallel" (v7x megacore).
        o_ref[...] = jnp.broadcast_to(total, (1, 128))

    return kernel


def triplet_loss(anchor, positive, negative, margin, *, eps: float = 1e-8,
                 block_rows: int | None = None, use_mxu_reductions: bool = True):
    """Pallas TPU triplet loss. Inputs: (..., D); cosine over last dim."""
    assert anchor.shape == positive.shape == negative.shape
    assert anchor.ndim >= 2
    d = anchor.shape[-1]
    a2 = anchor.reshape(-1, d)
    p2 = positive.reshape(-1, d)
    n2 = negative.reshape(-1, d)
    b = a2.shape[0]

    itemsize = jnp.dtype(anchor.dtype).itemsize
    min_rows = 16 if itemsize < 4 else 8          # sublane packing (bf16 x2)
    sub_rows_pref = 512 if itemsize < 4 else 256  # in-kernel compute chunk

    if block_rows is None:
        rows_by_bytes = _TARGET_STEP_BYTES // (3 * max(d, 1) * itemsize)
        rows_by_vmem = _VMEM_INPUT_FOOTPRINT_CAP // (3 * 2 * max(d, 1) * itemsize)
        rows = max(min_rows, min(rows_by_bytes, rows_by_vmem))
        block_rows = min(rows, _round_up(b, min_rows))
    block_rows = max(min_rows, _round_up(int(block_rows), min_rows))

    sub_rows = min(sub_rows_pref, block_rows)
    block_rows = _round_up(block_rows, sub_rows)   # whole number of sub-chunks

    num_tiles = pl.cdiv(b, block_rows)
    need_mask = (num_tiles * block_rows) != b

    input_footprint = 3 * 2 * block_rows * d * itemsize
    vmem_limit = int(min(_VMEM_LIMIT_CAP,
                         max(16 * _MIB, input_footprint + 8 * _MIB)))

    kernel = _make_triplet_kernel(margin, eps, b, block_rows, sub_rows, d,
                                  need_mask, use_mxu_reductions)

    out = pl.pallas_call(
        kernel,
        out_shape=jax.ShapeDtypeStruct((1, num_tiles * 128), jnp.float32),
        grid=(num_tiles,),
        in_specs=[
            pl.BlockSpec((block_rows, d), lambda i: (i, 0)),
            pl.BlockSpec((block_rows, d), lambda i: (i, 0)),
            pl.BlockSpec((block_rows, d), lambda i: (i, 0)),
        ],
        out_specs=pl.BlockSpec((1, 128), lambda i: (0, i)),
        compiler_params=pltpu.CompilerParams(
            dimension_semantics=("parallel",),
            vmem_limit_bytes=vmem_limit,
        ),
        cost_estimate=pl.CostEstimate(
            flops=10 * b * d,
            transcendentals=2 * b,
            bytes_accessed=3 * b * d * itemsize + 4 * num_tiles * 128,
        ),
    )(a2, p2, n2)

    partials = out.reshape(num_tiles, 128)[:, 0]
    # Single divide by the true batch size (not a mean of per-tile means).
    return jnp.sum(partials) / jnp.float32(b)


if __name__ == "__main__":
    key = jax.random.PRNGKey(0)
    k1, k2, k3 = jax.random.split(key, 3)
    margin = 0.5

    def _ref(a, p, n, margin, eps=1e-8):
        a = a.astype(jnp.float32)
        p = p.astype(jnp.float32)
        n = n.astype(jnp.float32)

        def cos(x, y):
            denom = jnp.sqrt(jnp.maximum(
                jnp.sum(x * x, axis=-1) * jnp.sum(y * y, axis=-1), eps * eps))
            return jnp.sum(x * y, axis=-1) / denom

        return jnp.mean(jnp.maximum(margin - cos(a, p) + cos(a, n), 0.0))

    # Case 1: small batch, explicit tile -> 2-tile grid with a ragged last tile.
    B, D = 24, 128
    a = jax.random.normal(k1, (B, D), dtype=jnp.float32)
    p = jax.random.normal(k2, (B, D), dtype=jnp.float32)
    n = jax.random.normal(k3, (B, D), dtype=jnp.float32)

    loss = triplet_loss(a, p, n, margin, block_rows=16)
    jax.block_until_ready(loss)
    ref = _ref(a, p, n, margin)
    assert jnp.allclose(loss, ref, atol=1e-4, rtol=1e-4), (loss, ref)

    # Case 2: same inputs, automatic tile sizing (single tile, no mask path).
    loss2 = triplet_loss(a, p, n, margin)
    jax.block_until_ready(loss2)
    assert jnp.allclose(loss2, ref, atol=1e-4, rtol=1e-4), (loss2, ref)

    # Case 3: batch large enough to exercise the in-kernel sub-chunk loop
    # (block_rows rounds to 768 -> 3 x 256-row sub-chunks + ragged mask).
    B3 = 640
    a3 = jax.random.normal(k1, (B3, D), dtype=jnp.float32)
    p3 = jax.random.normal(k2, (B3, D), dtype=jnp.float32)
    n3 = jax.random.normal(k3, (B3, D), dtype=jnp.float32)
    loss3 = triplet_loss(a3, p3, n3, margin)
    jax.block_until_ready(loss3)
    ref3 = _ref(a3, p3, n3, margin)
    assert jnp.allclose(loss3, ref3, atol=1e-4, rtol=1e-4), (loss3, ref3)

    # Case 4: native bf16 transport (in-kernel f32 upcast; halves HBM traffic).
    a4, p4, n4 = (x.astype(jnp.bfloat16) for x in (a, p, n))
    loss4 = triplet_loss(a4, p4, n4, margin)
    jax.block_until_ready(loss4)
    ref4 = _ref(a4, p4, n4, margin)
    assert jnp.allclose(loss4, ref4, atol=1e-3, rtol=1e-3), (loss4, ref4)

    print("KERNEL_OK")
</pallas_src>

<mosaic_0001>
module attributes {stable_mosaic.version = 11 : i64} {
  func.func @kernel(%arg0: i32, %arg1: memref<16x128xf32, #tpu.memory_space<vmem>>, %arg2: memref<16x128xf32, #tpu.memory_space<vmem>>, %arg3: memref<16x128xf32, #tpu.memory_space<vmem>>, %arg4: memref<1x128xf32, #tpu.memory_space<vmem>>) attributes {dimension_semantics = [#tpu.dimension_semantics<parallel>], iteration_bounds = array<i64: 2>, scalar_prefetch = 0 : i64, scratch_operands = 0 : i64, tpu.core_type = #tpu.core_type<tc>, window_params = [{transform_indices = @transform_0, window_bounds = array<i64: 16, 128>}, {transform_indices = @transform_1, window_bounds = array<i64: 16, 128>}, {transform_indices = @transform_2, window_bounds = array<i64: 16, 128>}, {transform_indices = @transform_3, window_bounds = array<i64: 1, 128>}]} {
    %c16_i32 = arith.constant 16 : i32
    %0 = arith.muli %arg0, %c16_i32 : i32
    %cst = arith.constant 1.000000e+00 : f32
    %1 = vector.broadcast %cst : f32 to vector<128x1xf32>
    %c0 = arith.constant 0 : index
    %c0_0 = arith.constant 0 : index
    %2 = vector.load %arg1[%c0, %c0_0] : memref<16x128xf32, #tpu.memory_space<vmem>>, vector<16x128xf32>
    %c0_1 = arith.constant 0 : index
    %c0_2 = arith.constant 0 : index
    %3 = vector.load %arg2[%c0_1, %c0_2] : memref<16x128xf32, #tpu.memory_space<vmem>>, vector<16x128xf32>
    %c0_3 = arith.constant 0 : index
    %c0_4 = arith.constant 0 : index
    %4 = vector.load %arg3[%c0_3, %c0_4] : memref<16x128xf32, #tpu.memory_space<vmem>>, vector<16x128xf32>
    %5 = arith.mulf %2, %2 : vector<16x128xf32>
    %cst_5 = arith.constant dense<0.000000e+00> : vector<16x1xf32>
    %6 = tpu.matmul %5, %1, %cst_5 {dimension_numbers = #tpu.dot_dimension_numbers<[1], [0], [0], [1], [0, 0, 1, 1], [], []>} : vector<16x128xf32>, vector<128x1xf32>, vector<16x1xf32> -> vector<16x1xf32>
    %7 = arith.mulf %3, %3 : vector<16x128xf32>
    %cst_6 = arith.constant dense<0.000000e+00> : vector<16x1xf32>
    %8 = tpu.matmul %7, %1, %cst_6 {dimension_numbers = #tpu.dot_dimension_numbers<[1], [0], [0], [1], [0, 0, 1, 1], [], []>} : vector<16x128xf32>, vector<128x1xf32>, vector<16x1xf32> -> vector<16x1xf32>
    %9 = arith.mulf %4, %4 : vector<16x128xf32>
    %cst_7 = arith.constant dense<0.000000e+00> : vector<16x1xf32>
    %10 = tpu.matmul %9, %1, %cst_7 {dimension_numbers = #tpu.dot_dimension_numbers<[1], [0], [0], [1], [0, 0, 1, 1], [], []>} : vector<16x128xf32>, vector<128x1xf32>, vector<16x1xf32> -> vector<16x1xf32>
    %11 = arith.mulf %2, %3 : vector<16x128xf32>
    %cst_8 = arith.constant dense<0.000000e+00> : vector<16x1xf32>
    %12 = tpu.matmul %11, %1, %cst_8 {dimension_numbers = #tpu.dot_dimension_numbers<[1], [0], [0], [1], [0, 0, 1, 1], [], []>} : vector<16x128xf32>, vector<128x1xf32>, vector<16x1xf32> -> vector<16x1xf32>
    %13 = arith.mulf %2, %4 : vector<16x128xf32>
    %cst_9 = arith.constant dense<0.000000e+00> : vector<16x1xf32>
    %14 = tpu.matmul %13, %1, %cst_9 {dimension_numbers = #tpu.dot_dimension_numbers<[1], [0], [0], [1], [0, 0, 1, 1], [], []>} : vector<16x128xf32>, vector<128x1xf32>, vector<16x1xf32> -> vector<16x1xf32>
    %15 = arith.mulf %6, %8 : vector<16x1xf32>
    %cst_10 = arith.constant 1.000000e-16 : f32
    %16 = vector.broadcast %cst_10 : f32 to vector<16x1xf32>
    %17 = arith.maximumf %15, %16 : vector<16x1xf32>
    %18 = math.rsqrt %17 : vector<16x1xf32>
    %19 = arith.mulf %12, %18 : vector<16x1xf32>
    %20 = arith.mulf %6, %10 : vector<16x1xf32>
    %cst_11 = arith.constant 1.000000e-16 : f32
    %21 = vector.broadcast %cst_11 : f32 to vector<16x1xf32>
    %22 = arith.maximumf %20, %21 : vector<16x1xf32>
    %23 = math.rsqrt %22 : vector<16x1xf32>
    %24 = arith.mulf %14, %23 : vector<16x1xf32>
    %cst_12 = arith.constant 5.000000e-01 : f32
    %25 = vector.broadcast %cst_12 : f32 to vector<16x1xf32>
    %26 = arith.subf %25, %19 : vector<16x1xf32>
    %27 = arith.addf %26, %24 : vector<16x1xf32>
    %cst_13 = arith.constant 0.000000e+00 : f32
    %28 = vector.broadcast %cst_13 : f32 to vector<16x1xf32>
    %29 = arith.maximumf %27, %28 : vector<16x1xf32>
    %c0_i32 = arith.constant 0 : i32
    %30 = arith.addi %0, %c0_i32 : i32
    %31 = tpu.iota {dimensions = array<i32: 0>} : vector<16x1xi32>
    %32 = vector.broadcast %30 : i32 to vector<16x1xi32>
    %33 = arith.addi %32, %31 : vector<16x1xi32>
    %c24_i32 = arith.constant 24 : i32
    %34 = vector.broadcast %c24_i32 : i32 to vector<16x1xi32>
    %35 = arith.cmpi slt, %33, %34 : vector<16x1xi32>
    %cst_14 = arith.constant 0.000000e+00 : f32
    %36 = vector.broadcast %cst_14 : f32 to vector<16x1xf32>
    %37 = arith.select %35, %29, %36 : vector<16x1xi1>, vector<16x1xf32>
    %cst_15 = arith.constant dense<0.000000e+00> : vector<1xf32>
    %38 = vector.multi_reduction <add>, %37, %cst_15 [0] : vector<16x1xf32> to vector<1xf32>
    %39 = vector.shape_cast %38 : vector<1xf32> to vector<1x1xf32>
    %40 = vector.shape_cast %39 : vector<1x1xf32> to vector<1x1xf32>
    %41 = vector.broadcast %40 : vector<1x1xf32> to vector<1x128xf32>
    %c0_16 = arith.constant 0 : index
    %c0_17 = arith.constant 0 : index
    %42 = vector.load %arg4[%c0_16, %c0_17] : memref<1x128xf32, #tpu.memory_space<vmem>>, vector<1x128xf32>
    tpu.vector_store %arg4[%c0_16, %c0_17], %41 {strides = array<i32>} : memref<1x128xf32, #tpu.memory_space<vmem>>, vector<1x128xf32>,
    return
  }
  func.func @transform_0(%arg0: i32) -> (i32, i32) {
    %c0_i32 = arith.constant 0 : i32
    %c0_i32_0 = arith.constant 0 : i32
    return %arg0, %c0_i32 : i32, i32
  }
  func.func @transform_1(%arg0: i32) -> (i32, i32) {
    %c0_i32 = arith.constant 0 : i32
    %c0_i32_0 = arith.constant 0 : i32
    return %arg0, %c0_i32 : i32, i32
  }
  func.func @transform_2(%arg0: i32) -> (i32, i32) {
    %c0_i32 = arith.constant 0 : i32
    %c0_i32_0 = arith.constant 0 : i32
    return %arg0, %c0_i32 : i32, i32
  }
  func.func @transform_3(%arg0: i32) -> (i32, i32) {
    %c0_i32 = arith.constant 0 : i32
    %c0_i32_0 = arith.constant 0 : i32
    return %c0_i32, %arg0 : i32, i32
  }
}

</mosaic_0001>

<llo_original>
// kernel: tpu_custom_call.1
$region0: #{tpu_custom_call.1}
  #allocation0 [shape = 'u32[]', space=smem, size = 0x4, offset = 0x4, fixed_abs, tag = 'smem constant byte address 0x4 - core index']
  #allocation1 [shape = 'u32[144,128]{1,0:T(1,128)}', space=vmem, size = 0x12000, scoped, tag = 'internal scratch']
  %s0 = inlined_call_operand.hbm [shape: f32[24,128], index: 0, kind: input, shape index: {}]
  %s1 = inlined_call_operand.hbm [shape: f32[24,128], index: 1, kind: input, shape index: {}]
  %s2 = inlined_call_operand.hbm [shape: f32[24,128], index: 2, kind: input, shape index: {}]
  %s3 = inlined_call_operand.hbm [shape: f32[1,256], index: 3, kind: output, shape index: {}]
  %s4 = sld [smem:[#allocation0]]
  $region57: #{tpu_custom_call.1} parent=0
    _
  %s6 = ssub.s32 1, %s4
  %s7 = scalar_select 0, %s6, %s4
  $region1: #{tpu_custom_call.1} parent=0
    #allocation2 [shape = 'u8[16384]{0}', space=vmem, size = 0x4000, scoped, tag = 'input window, operand 0']
    #allocation3 [shape = 's32[2]{0}', space=sflag, size = 0x8, scoped, tag = 'scoped memory for tpu_custom_call.1']
    #allocation4 [shape = 's32[2]{0}', space=sflag, size = 0x8, scoped, tag = 'scoped memory for tpu_custom_call.1']
    #allocation5 [shape = 'u8[16384]{0}', space=vmem, size = 0x4000, scoped, tag = 'input window, operand 1']
    #allocation6 [shape = 's32[2]{0}', space=sflag, size = 0x8, scoped, tag = 'scoped memory for tpu_custom_call.1']
    #allocation7 [shape = 'u8[16384]{0}', space=vmem, size = 0x4000, scoped, tag = 'input window, operand 2']
    #allocation8 [shape = 'u8[1024]{0}', space=vmem, size = 0x400, scoped, tag = 'output window, operand 0']
    %8 = vsyncpa [#allocation3], 0
    %s9 = scalar_lea.sflag [#allocation3], 1
    %10 = vsyncpa %s9, 0
    %11 = vsyncpa [#allocation6], 0
    %s12 = scalar_lea.sflag [#allocation6], 1
    %13 = vsyncpa %s12, 0
    %14 = vsyncpa [#allocation4], 0
    %s15 = scalar_lea.sflag [#allocation4], 1
    %16 = vsyncpa %s15, 0
    loop: start=0, step=1, limit=4
    $region2: #{tpu_custom_call.1} parent=1 // loop_pre_header
      _
    $region3: #{tpu_custom_call.1} parent=1 // loop_header
      %s18 = sphi 0, %s22
      %p19 = scmp.ge.s32.totalorder %s18, 4
      %s28 = sphi 0, %s30
      %s31 = sphi 0, %s28
      %s32 = sphi 0, %s31
      %s48 = sphi 0, %s32
      %s54 = sphi 0, %s56
      %s57 = sphi 0, %s54
      %s58 = sphi 0, %s57
      %s74 = sphi 0, %s58
      %s80 = sphi 0, %s82
      %s83 = sphi 0, %s80
      %s84 = sphi 0, %s83
      %s100 = sphi 0, %s84
      %s106 = sphi 0, %s108
      %s109 = sphi 0, %s106
      %s110 = sphi 0, %s109
      %s126 = sphi 0, %s110
    $region4: #{tpu_custom_call.1} parent=1 // loop_header_branch
      %21 = sbr.rel (%p19) target = $region8
    $region5: #{tpu_custom_call.1} parent=1 // loop_body
      %s23 = ssub.s32 %s18, 1
      %s24 = ssub.s32 %s18, 2
      %s25 = sadd.s32 %s18, 1
      %s26 = ssub.s32 %s18, %s25
      %p27 = scmp.eq.s32.totalorder %s26, 0
      %s29 = sadd.s32 %s28, 1
      %s30 = scalar_select %p27, %s28, %s29
      %p33 = pneg %p27
      %p34 = scmp.eq.s32.totalorder %s18, 1
      %p35 = por %p33, %p34
      %p36 = scmp.ne.s32.totalorder %s28, %s31
      %p37 = scmp.eq.s32.totalorder %s18, 0
      %p38 = por %p36, %p37
      %p39 = scmp.ne.s32.totalorder %s28, %s31
      %p40 = scmp.eq.s32.totalorder %s23, 1
      %p41 = por %p39, %p40
      %p42 = scmp.ne.s32.totalorder %s31, %s32
      %p43 = scmp.eq.s32.totalorder %s23, 0
      %p44 = por %p42, %p43
      %p45 = scmp.ne.s32.totalorder %s31, %s32
      %p46 = scmp.eq.s32.totalorder %s24, 1
      %p47 = por %p45, %p46
      %p49 = scmp.ne.s32.totalorder %s32, %s48
      %p50 = scmp.eq.s32.totalorder %s24, 0
      %p51 = por %p49, %p50
      %s52 = ssub.s32 %s18, %s25
      %p53 = scmp.eq.s32.totalorder %s52, 0
      %s55 = sadd.s32 %s54, 1
      %s56 = scalar_select %p53, %s54, %s55
      %p59 = pneg %p53
      %p60 = scmp.eq.s32.totalorder %s18, 1
      %p61 = por %p59, %p60
      %p62 = scmp.ne.s32.totalorder %s54, %s57
      %p63 = scmp.eq.s32.totalorder %s18, 0
      %p64 = por %p62, %p63
      %p65 = scmp.ne.s32.totalorder %s54, %s57
      %p66 = scmp.eq.s32.totalorder %s23, 1
      %p67 = por %p65, %p66
      %p68 = scmp.ne.s32.totalorder %s57, %s58
      %p69 = scmp.eq.s32.totalorder %s23, 0
      %p70 = por %p68, %p69
      %p71 = scmp.ne.s32.totalorder %s57, %s58
      %p72 = scmp.eq.s32.totalorder %s24, 1
      %p73 = por %p71, %p72
      %p75 = scmp.ne.s32.totalorder %s58, %s74
      %p76 = scmp.eq.s32.totalorder %s24, 0
      %p77 = por %p75, %p76
      %s78 = ssub.s32 %s18, %s25
      %p79 = scmp.eq.s32.totalorder %s78, 0
      %s81 = sadd.s32 %s80, 1
      %s82 = scalar_select %p79, %s80, %s81
      %p85 = pneg %p79
      %p86 = scmp.eq.s32.totalorder %s18, 1
      %p87 = por %p85, %p86
      %p88 = scmp.ne.s32.totalorder %s80, %s83
      %p89 = scmp.eq.s32.totalorder %s18, 0
      %p90 = por %p88, %p89
      %p91 = scmp.ne.s32.totalorder %s80, %s83
      %p92 = scmp.eq.s32.totalorder %s23, 1
      %p93 = por %p91, %p92
      %p94 = scmp.ne.s32.totalorder %s83, %s84
      %p95 = scmp.eq.s32.totalorder %s23, 0
      %p96 = por %p94, %p95
      %p97 = scmp.ne.s32.totalorder %s83, %s84
      %p98 = scmp.eq.s32.totalorder %s24, 1
      %p99 = por %p97, %p98
      %p101 = scmp.ne.s32.totalorder %s84, %s100
      %p102 = scmp.eq.s32.totalorder %s24, 0
      %p103 = por %p101, %p102
      %s104 = ssub.s32 %s18, %s25
      %p105 = scmp.eq.s32.totalorder %s104, 0
      %s107 = sadd.s32 %s106, 1
      %s108 = scalar_select %p105, %s106, %s107
      %p111 = pneg %p105
      %p112 = scmp.eq.s32.totalorder %s18, 1
      %p113 = por %p111, %p112
      %p114 = scmp.ne.s32.totalorder %s106, %s109
      %p115 = scmp.eq.s32.totalorder %s18, 0
      %p116 = por %p114, %p115
      %p117 = scmp.ne.s32.totalorder %s106, %s109
      %p118 = scmp.eq.s32.totalorder %s23, 1
      %p119 = por %p117, %p118
      %p120 = scmp.ne.s32.totalorder %s109, %s110
      %p121 = scmp.eq.s32.totalorder %s23, 0
      %p122 = por %p120, %p121
      %p123 = scmp.ne.s32.totalorder %s109, %s110
      %p124 = scmp.eq.s32.totalorder %s24, 1
      %p125 = por %p123, %p124
      %p127 = scmp.ne.s32.totalorder %s110, %s126
      %p128 = scmp.eq.s32.totalorder %s24, 0
      %p129 = por %p127, %p128
      %p130 = scmp.le.s32.totalorder 1, %s18
      %p131 = scmp.lt.s32.totalorder %s18, 3
      %p132 = pnand %p130, %p131
      %p133 = pneg %p132
      // Predicated region
      $region9: #{tpu_custom_call.1} parent=5 // pred_check
        _
      $region10: #{tpu_custom_call.1} parent=5 // pred_check_branch
        %135 = sbr.rel (%p132) target = $region12
      $region11: #{tpu_custom_call.1} parent=5 // pred_region
        %s136 = ssub.s32 %s18, 1
      $region12: #{tpu_custom_call.1} parent=5 // pred_fallthru
        _
      %p137 = scmp.lt.s32.totalorder %s18, 2
      // Predicated region
      $region13: #{tpu_custom_call.1} parent=5 // pred_check
        %p138 = pneg %p137
      $region14: #{tpu_custom_call.1} parent=5 // pred_check_branch
        %140 = sbr.rel (%p138) target = $region16
      $region15: #{tpu_custom_call.1} parent=5 // pred_region
        // Predicated region
        $region17: #{tpu_custom_call.1} parent=15 // pred_check
          %p141 = pneg %p38
        $region18: #{tpu_custom_call.1} parent=15 // pred_check_branch
          %143 = sbr.rel (%p141) target = $region20
        $region19: #{tpu_custom_call.1} parent=15 // pred_region
          %s144 = sand.u32 %s28, 1
          %s145 = scalar_lea.sflag [#allocation3], %s144
          %s146 = sand.u32 %s28, 1
          %s147 = smul.addr %s146, 16
          %s148 = scalar_lea.vmem [#allocation2], %s147
          %s149 = smul.u32 2, %s18
          %s150 = ssub.s32 3, %s149
          %p151 = scmp.lt.s32.totalorder %s150, 2
          %s152 = scalar_select %p151, %s150, 2
          %s153 = smul.u32 128, %s152
          %s155 = ssub.s32 256, %s153
          %156 = vsyncadd %s145, %s155
          %p157 = scmp.ne.s32.totalorder 0, %s153
          %s158 = smul.addr %s149, 128
          %s159 = scalar_lea.hbm %s0, %s158
          %s160 = smul.u32 8, %s152
          %s161 = sshll.u32 %s148, 4
          %s162 = int_to_ptr.vmem [resolvable:$true] %s161
          %s163 = sshll.u32 %s160, 4
          %167 = dma.hbm_to_vmem [thread:$0]  (%p157), %s159, %s163, %s162, %s145, 128, 128, 8
        $region20: #{tpu_custom_call.1} parent=15 // pred_fallthru
          _
        // Predicated region
        $region21: #{tpu_custom_call.1} parent=15 // pred_check
          %p168 = pneg %p64
        $region22: #{tpu_custom_call.1} parent=15 // pred_check_branch
          %170 = sbr.rel (%p168) target = $region24
        $region23: #{tpu_custom_call.1} parent=15 // pred_region
          %s171 = sand.u32 %s18, 1
          %s172 = scalar_lea.sflag [#allocation6], %s171
          %s173 = sand.u32 %s54, 1
          %s174 = smul.addr %s173, 16
          %s175 = scalar_lea.vmem [#allocation5], %s174
          %s176 = smul.u32 2, %s18
          %s177 = ssub.s32 3, %s176
          %p178 = scmp.lt.s32.totalorder %s177, 2
          %s179 = scalar_select %p178, %s177, 2
          %s180 = smul.u32 128, %s179
          %s182 = ssub.s32 256, %s180
          %183 = vsyncadd %s172, %s182
          %p184 = scmp.ne.s32.totalorder 0, %s180
          %s185 = smul.addr %s176, 128
          %s186 = scalar_lea.hbm %s1, %s185
          %s187 = smul.u32 8, %s179
          %s188 = sshll.u32 %s175, 4
          %s189 = int_to_ptr.vmem [resolvable:$true] %s188
          %s190 = sshll.u32 %s187, 4
          %194 = dma.hbm_to_vmem [thread:$0]  (%p184), %s186, %s190, %s189, %s172, 128, 128, 8
        $region24: #{tpu_custom_call.1} parent=15 // pred_fallthru
          _
        // Predicated region
        $region25: #{tpu_custom_call.1} parent=15 // pred_check
          %p195 = pneg %p90
        $region26: #{tpu_custom_call.1} parent=15 // pred_check_branch
          %197 = sbr.rel (%p195) target = $region28
        $region27: #{tpu_custom_call.1} parent=15 // pred_region
          %s198 = sand.u32 %s18, 1
          %s199 = scalar_lea.sflag [#allocation6], %s198
          %s200 = sand.u32 %s80, 1
          %s201 = smul.addr %s200, 16
          %s202 = scalar_lea.vmem [#allocation7], %s201
          %s203 = smul.u32 2, %s18
          %s204 = ssub.s32 3, %s203
          %p205 = scmp.lt.s32.totalorder %s204, 2
          %s206 = scalar_select %p205, %s204, 2
          %s207 = smul.u32 128, %s206
          %s209 = ssub.s32 256, %s207
          %210 = vsyncadd %s199, %s209
          %p211 = scmp.ne.s32.totalorder 0, %s207
          %s212 = smul.addr %s203, 128
          %s213 = scalar_lea.hbm %s2, %s212
          %s214 = smul.u32 8, %s206
          %s215 = sshll.u32 %s202, 4
          %s216 = int_to_ptr.vmem [resolvable:$true] %s215
          %s217 = sshll.u32 %s214, 4
          %221 = dma.hbm_to_vmem [thread:$0]  (%p211), %s213, %s217, %s216, %s199, 128, 128, 8
        $region28: #{tpu_custom_call.1} parent=15 // pred_fallthru
          _
      $region16: #{tpu_custom_call.1} parent=5 // pred_fallthru
        _
      %p222 = scmp.le.s32.totalorder 1, %s18
      %p223 = scmp.lt.s32.totalorder %s18, 3
      %p224 = pnand %p222, %p223
      %p225 = pneg %p224
      // Predicated region
      $region29: #{tpu_custom_call.1} parent=5 // pred_check
        _
      $region30: #{tpu_custom_call.1} parent=5 // pred_check_branch
        %227 = sbr.rel (%p224) target = $region32
      $region31: #{tpu_custom_call.1} parent=5 // pred_region
        %s228 = ssub.s32 %s18, 1
        %s229 = sand.u32 %s31, 1
        %s230 = scalar_lea.sflag [#allocation3], %s229
        %s231 = sand.u32 %s31, 1
        %s232 = smul.addr %s231, 16
        %s233 = scalar_lea.vmem [#allocation2], %s232
        // Predicated region
        $region33: #{tpu_custom_call.1} parent=31 // pred_check
          %p234 = pneg %p44
        $region34: #{tpu_custom_call.1} parent=31 // pred_check_branch
          %236 = sbr.rel (%p234) target = $region36
        $region35: #{tpu_custom_call.1} parent=31 // pred_region
          %237 = dma.done %s230, 256
        $region36: #{tpu_custom_call.1} parent=31 // pred_fallthru
          _
        %s238 = sand.u32 %s23, 1
        %s239 = scalar_lea.sflag [#allocation6], %s238
        %s240 = sand.u32 %s57, 1
        %s241 = smul.addr %s240, 16
        %s242 = scalar_lea.vmem [#allocation5], %s241
        // Predicated region
        $region37: #{tpu_custom_call.1} parent=31 // pred_check
          %p243 = pneg %p70
        $region38: #{tpu_custom_call.1} parent=31 // pred_check_branch
          %245 = sbr.rel (%p243) target = $region40
        $region39: #{tpu_custom_call.1} parent=31 // pred_region
          %246 = dma.done %s239, 256
        $region40: #{tpu_custom_call.1} parent=31 // pred_fallthru
          _
        %s247 = sand.u32 %s23, 1
        %s248 = scalar_lea.sflag [#allocation6], %s247
        %s249 = sand.u32 %s83, 1
        %s250 = smul.addr %s249, 16
        %s251 = scalar_lea.vmem [#allocation7], %s250
        // Predicated region
        $region41: #{tpu_custom_call.1} parent=31 // pred_check
          %p252 = pneg %p96
        $region42: #{tpu_custom_call.1} parent=31 // pred_check_branch
          %254 = sbr.rel (%p252) target = $region44
        $region43: #{tpu_custom_call.1} parent=31 // pred_region
          %255 = dma.done %s248, 256
        $region44: #{tpu_custom_call.1} parent=31 // pred_fallthru
          _
        %s256 = sand.u32 %s31, 1
        %s257 = scalar_lea.sflag [#allocation3], %s256
        %s258 = sand.u32 %s31, 1
        %s259 = smul.addr %s258, 16
        %s260 = scalar_lea.vmem [#allocation2], %s259
        %p261 = pneg %p44
        %p262 = pneg %p41
        %s263 = sand.u32 %s23, 1
        %s264 = scalar_lea.sflag [#allocation6], %s263
        %s265 = sand.u32 %s57, 1
        %s266 = smul.addr %s265, 16
        %s267 = scalar_lea.vmem [#allocation5], %s266
        %p268 = pneg %p70
        %p269 = pneg %p67
        %s270 = sand.u32 %s23, 1
        %s271 = scalar_lea.sflag [#allocation6], %s270
        %s272 = sand.u32 %s83, 1
        %s273 = smul.addr %s272, 16
        %s274 = scalar_lea.vmem [#allocation7], %s273
        %p275 = pneg %p96
        %p276 = pneg %p93
        %p277 = pneg %p122
        %p278 = pneg %p119
        %s279 = sand.u32 %s109, 1
        %s280 = scalar_lea.sflag [#allocation4], %s279
        %s281 = sand.u32 %s109, 1
        %s282 = scalar_lea.vmem [#allocation8], %s281
        %s283 = smul.u32 2, %s23
        %s284 = ssub.s32 3, %s283
        %p285 = scmp.lt.s32.totalorder %s284, 2
        %s286 = scalar_select %p285, %s284, 2
        %s287 = smul.u32 128, %s286
        %s288 = smul.u32 2, %s23
        %s289 = ssub.s32 3, %s288
        %p290 = scmp.lt.s32.totalorder %s289, 2
        %s291 = scalar_select %p290, %s289, 2
        %s292 = smul.u32 128, %s291
        %s293 = smul.u32 2, %s23
        %s294 = ssub.s32 3, %s293
        %p295 = scmp.lt.s32.totalorder %s294, 2
        %s296 = scalar_select %p295, %s294, 2
        %s297 = smul.u32 128, %s296
        %s298 = smul.u32 %s23, 16
        %v299 = vld [vmem:[%s233] sm:$0xff]
        %v300 = vld [vmem:[%s233 + $0x8] sm:$0xff]
        %v301 = vld [vmem:[%s242] sm:$0xff]
        %v302 = vld [vmem:[%s242 + $0x8] sm:$0xff]
        %v303 = vld [vmem:[%s251] sm:$0xff]
        %v304 = vld [vmem:[%s251 + $0x8] sm:$0xff]
        %v305 = vmul.f32 %v299, %v299
        %v306 = vmul.f32 %v300, %v300
        %307 = vmatprep.subr.mxu0 0.0
        %308 = vmatpush1.msra.mxu0 1.0
        %309 = vmatprep.subr.mxu0 0.0
        %310 = vmatpush1.msra.mxu0 1.0
        %311 = vmatprep.subr.mxu0 0.0
        %312 = vmatpush1.msra.mxu0 1.0
        %313 = vmatprep.subr.mxu0 0.0
        %314 = vmatpush1.msra.mxu0 1.0
        %315 = vmatprep.subr.mxu0 0.0
        %316 = vmatpush1.msra.mxu0 1.0
        %317 = vmatprep.subr.mxu0 0.0
        %318 = vmatpush1.msra.mxu0 1.0
        %319 = vmatprep.subr.mxu0 0.0
        %320 = vmatpush1.msra.mxu0 1.0
        %321 = vmatprep.subr.mxu0 0.0
        %322 = vmatpush1.msra.mxu0 1.0
        %323 = vmatprep.subr.mxu0 0.0
        %324 = vmatpush1.msra.mxu0 1.0
        %325 = vmatprep.subr.mxu0 0.0
        %326 = vmatpush1.msra.mxu0 1.0
        %327 = vmatprep.subr.mxu0 0.0
        %328 = vmatpush1.msra.mxu0 1.0
        %329 = vmatprep.subr.mxu0 0.0
        %330 = vmatpush1.msra.mxu0 1.0
        %331 = vmatprep.subr.mxu0 0.0
        %332 = vmatpush1.msra.mxu0 1.0
        %333 = vmatprep.subr.mxu0 0.0
        %334 = vmatpush1.msra.mxu0 1.0
        %335 = vmatprep.subr.mxu0 0.0
        %336 = vmatpush1.msra.mxu0 1.0
        %337 = vmatprep.subr.mxu0 0.0
        %338 = vmatpush1.msra.mxu0 1.0
        %339 = vmatprep.subr.mxu0 0.0
        %340 = vmatpush1.msra.mxu0 0.0
        %341 = vmatprep.subr.mxu0 0.0
        %342 = vmatpush1.msra.mxu0 0.0
        %343 = vmatprep.subr.mxu0 0.0
        %344 = vmatpush1.msra.mxu0 0.0
        %345 = vmatprep.subr.mxu0 0.0
        %346 = vmatpush1.msra.mxu0 0.0
        %347 = vmatprep.subr.mxu0 0.0
        %348 = vmatpush1.msra.mxu0 0.0
        %349 = vmatprep.subr.mxu0 0.0
        %350 = vmatpush1.msra.mxu0 0.0
        %351 = vmatprep.subr.mxu0 0.0
        %352 = vmatpush1.msra.mxu0 0.0
        %353 = vmatprep.subr.mxu0 0.0
        %354 = vmatpush1.msra.mxu0 0.0
        %355 = vmatprep.subr.mxu0 0.0
        %356 = vmatpush1.msra.mxu0 0.0
        %357 = vmatprep.subr.mxu0 0.0
        %358 = vmatpush1.msra.mxu0 0.0
        %359 = vmatprep.subr.mxu0 0.0
        %360 = vmatpush1.msra.mxu0 0.0
        %361 = vmatprep.subr.mxu0 0.0
        %362 = vmatpush1.msra.mxu0 0.0
        %363 = vmatprep.subr.mxu0 0.0
        %364 = vmatpush1.msra.mxu0 0.0
        %365 = vmatprep.subr.mxu0 0.0
        %366 = vmatpush1.msra.mxu0 0.0
        %367 = vmatprep.subr.mxu0 0.0
        %368 = vmatpush1.msra.mxu0 0.0
        %369 = vmatprep.subr.mxu0 0.0
        %370 = vmatpush1.msra.mxu0 0.0
        %371 = vmatprep.mubr.f32.mxu0 0.0
        %372 = vmatmul.mubr.f32.gmra.mrb[0].mxu0 %v305
        %v373 = vpop.f32.mrb[0].mxu0
        %v374 = vadd.f32 0.0, %v373
        %v375 = vpop.f32.mrb[0].mxu0
        %376 = vmatprep.mubr.f32.mxu0 0.0
        %377 = vmatmul.mubr.f32.gmra.mrb[0].mxu0 %v306
        %v378 = vpop.f32.mrb[0].mxu0
        %v379 = vadd.f32 0.0, %v378
        %v380 = vpop.f32.mrb[0].mxu0
        %381 = vdwg.mxu0
        %v382 = vmul.f32 %v301, %v301
        %v383 = vmul.f32 %v302, %v302
        %384 = vmatprep.subr.mxu0 0.0
        %385 = vmatpush1.msra.mxu0 1.0
        %386 = vmatprep.subr.mxu0 0.0
        %387 = vmatpush1.msra.mxu0 1.0
        %388 = vmatprep.subr.mxu0 0.0
        %389 = vmatpush1.msra.mxu0 1.0
        %390 = vmatprep.subr.mxu0 0.0
        %391 = vmatpush1.msra.mxu0 1.0
        %392 = vmatprep.subr.mxu0 0.0
        %393 = vmatpush1.msra.mxu0 1.0
        %394 = vmatprep.subr.mxu0 0.0
        %395 = vmatpush1.msra.mxu0 1.0
        %396 = vmatprep.subr.mxu0 0.0
        %397 = vmatpush1.msra.mxu0 1.0
        %398 = vmatprep.subr.mxu0 0.0
        %399 = vmatpush1.msra.mxu0 1.0
        %400 = vmatprep.subr.mxu0 0.0
        %401 = vmatpush1.msra.mxu0 1.0
        %402 = vmatprep.subr.mxu0 0.0
        %403 = vmatpush1.msra.mxu0 1.0
        %404 = vmatprep.subr.mxu0 0.0
        %405 = vmatpush1.msra.mxu0 1.0
        %406 = vmatprep.subr.mxu0 0.0
        %407 = vmatpush1.msra.mxu0 1.0
        %408 = vmatprep.subr.mxu0 0.0
        %409 = vmatpush1.msra.mxu0 1.0
        %410 = vmatprep.subr.mxu0 0.0
        %411 = vmatpush1.msra.mxu0 1.0
        %412 = vmatprep.subr.mxu0 0.0
        %413 = vmatpush1.msra.mxu0 1.0
        %414 = vmatprep.subr.mxu0 0.0
        %415 = vmatpush1.msra.mxu0 1.0
        %416 = vmatprep.subr.mxu0 0.0
        %417 = vmatpush1.msra.mxu0 0.0
        %418 = vmatprep.subr.mxu0 0.0
        %419 = vmatpush1.msra.mxu0 0.0
        %420 = vmatprep.subr.mxu0 0.0
        %421 = vmatpush1.msra.mxu0 0.0
        %422 = vmatprep.subr.mxu0 0.0
        %423 = vmatpush1.msra.mxu0 0.0
        %424 = vmatprep.subr.mxu0 0.0
        %425 = vmatpush1.msra.mxu0 0.0
        %426 = vmatprep.subr.mxu0 0.0
        %427 = vmatpush1.msra.mxu0 0.0
        %428 = vmatprep.subr.mxu0 0.0
        %429 = vmatpush1.msra.mxu0 0.0
        %430 = vmatprep.subr.mxu0 0.0
        %431 = vmatpush1.msra.mxu0 0.0
        %432 = vmatprep.subr.mxu0 0.0
        %433 = vmatpush1.msra.mxu0 0.0
        %434 = vmatprep.subr.mxu0 0.0
        %435 = vmatpush1.msra.mxu0 0.0
        %436 = vmatprep.subr.mxu0 0.0
        %437 = vmatpush1.msra.mxu0 0.0
        %438 = vmatprep.subr.mxu0 0.0
        %439 = vmatpush1.msra.mxu0 0.0
        %440 = vmatprep.subr.mxu0 0.0
        %441 = vmatpush1.msra.mxu0 0.0
        %442 = vmatprep.subr.mxu0 0.0
        %443 = vmatpush1.msra.mxu0 0.0
        %444 = vmatprep.subr.mxu0 0.0
        %445 = vmatpush1.msra.mxu0 0.0
        %446 = vmatprep.subr.mxu0 0.0
        %447 = vmatpush1.msra.mxu0 0.0
        %448 = vmatprep.mubr.f32.mxu0 0.0
        %449 = vmatmul.mubr.f32.gmra.mrb[0].mxu0 %v382
        %v450 = vpop.f32.mrb[0].mxu0
        %v451 = vadd.f32 0.0, %v450
        %v452 = vpop.f32.mrb[0].mxu0
        %453 = vmatprep.mubr.f32.mxu0 0.0
        %454 = vmatmul.mubr.f32.gmra.mrb[0].mxu0 %v383
        %v455 = vpop.f32.mrb[0].mxu0
        %v456 = vadd.f32 0.0, %v455
        %v457 = vpop.f32.mrb[0].mxu0
        %458 = vdwg.mxu0
        %v459 = vmul.f32 %v303, %v303
        %v460 = vmul.f32 %v304, %v304
        %461 = vmatprep.subr.mxu0 0.0
        %462 = vmatpush1.msra.mxu0 1.0
        %463 = vmatprep.subr.mxu0 0.0
        %464 = vmatpush1.msra.mxu0 1.0
        %465 = vmatprep.subr.mxu0 0.0
        %466 = vmatpush1.msra.mxu0 1.0
        %467 = vmatprep.subr.mxu0 0.0
        %468 = vmatpush1.msra.mxu0 1.0
        %469 = vmatprep.subr.mxu0 0.0
        %470 = vmatpush1.msra.mxu0 1.0
        %471 = vmatprep.subr.mxu0 0.0
        %472 = vmatpush1.msra.mxu0 1.0
        %473 = vmatprep.subr.mxu0 0.0
        %474 = vmatpush1.msra.mxu0 1.0
        %475 = vmatprep.subr.mxu0 0.0
        %476 = vmatpush1.msra.mxu0 1.0
        %477 = vmatprep.subr.mxu0 0.0
        %478 = vmatpush1.msra.mxu0 1.0
        %479 = vmatprep.subr.mxu0 0.0
        %480 = vmatpush1.msra.mxu0 1.0
        %481 = vmatprep.subr.mxu0 0.0
        %482 = vmatpush1.msra.mxu0 1.0
        %483 = vmatprep.subr.mxu0 0.0
        %484 = vmatpush1.msra.mxu0 1.0
        %485 = vmatprep.subr.mxu0 0.0
        %486 = vmatpush1.msra.mxu0 1.0
        %487 = vmatprep.subr.mxu0 0.0
        %488 = vmatpush1.msra.mxu0 1.0
        %489 = vmatprep.subr.mxu0 0.0
        %490 = vmatpush1.msra.mxu0 1.0
        %491 = vmatprep.subr.mxu0 0.0
        %492 = vmatpush1.msra.mxu0 1.0
        %493 = vmatprep.subr.mxu0 0.0
        %494 = vmatpush1.msra.mxu0 0.0
        %495 = vmatprep.subr.mxu0 0.0
        %496 = vmatpush1.msra.mxu0 0.0
        %497 = vmatprep.subr.mxu0 0.0
        %498 = vmatpush1.msra.mxu0 0.0
        %499 = vmatprep.subr.mxu0 0.0
        %500 = vmatpush1.msra.mxu0 0.0
        %501 = vmatprep.subr.mxu0 0.0
        %502 = vmatpush1.msra.mxu0 0.0
        %503 = vmatprep.subr.mxu0 0.0
        %504 = vmatpush1.msra.mxu0 0.0
        %505 = vmatprep.subr.mxu0 0.0
        %506 = vmatpush1.msra.mxu0 0.0
        %507 = vmatprep.subr.mxu0 0.0
        %508 = vmatpush1.msra.mxu0 0.0
        %509 = vmatprep.subr.mxu0 0.0
        %510 = vmatpush1.msra.mxu0 0.0
        %511 = vmatprep.subr.mxu0 0.0
        %512 = vmatpush1.msra.mxu0 0.0
        %513 = vmatprep.subr.mxu0 0.0
        %514 = vmatpush1.msra.mxu0 0.0
        %515 = vmatprep.subr.mxu0 0.0
        %516 = vmatpush1.msra.mxu0 0.0
        %517 = vmatprep.subr.mxu0 0.0
        %518 = vmatpush1.msra.mxu0 0.0
        %519 = vmatprep.subr.mxu0 0.0
        %520 = vmatpush1.msra.mxu0 0.0
        %521 = vmatprep.subr.mxu0 0.0
        %522 = vmatpush1.msra.mxu0 0.0
        %523 = vmatprep.subr.mxu0 0.0
        %524 = vmatpush1.msra.mxu0 0.0
        %525 = vmatprep.mubr.f32.mxu0 0.0
        %526 = vmatmul.mubr.f32.gmra.mrb[0].mxu0 %v459
        %v527 = vpop.f32.mrb[0].mxu0
        %v528 = vadd.f32 0.0, %v527
        %v529 = vpop.f32.mrb[0].mxu0
        %530 = vmatprep.mubr.f32.mxu0 0.0
        %531 = vmatmul.mubr.f32.gmra.mrb[0].mxu0 %v460
        %v532 = vpop.f32.mrb[0].mxu0
        %v533 = vadd.f32 0.0, %v532
        %v534 = vpop.f32.mrb[0].mxu0
        %535 = vdwg.mxu0
        %v536 = vmul.f32 %v299, %v301
        %v537 = vmul.f32 %v300, %v302
        %538 = vmatprep.subr.mxu0 0.0
        %539 = vmatpush1.msra.mxu0 1.0
        %540 = vmatprep.subr.mxu0 0.0
        %541 = vmatpush1.msra.mxu0 1.0
        %542 = vmatprep.subr.mxu0 0.0
        %543 = vmatpush1.msra.mxu0 1.0
        %544 = vmatprep.subr.mxu0 0.0
        %545 = vmatpush1.msra.mxu0 1.0
        %546 = vmatprep.subr.mxu0 0.0
        %547 = vmatpush1.msra.mxu0 1.0
        %548 = vmatprep.subr.mxu0 0.0
        %549 = vmatpush1.msra.mxu0 1.0
        %550 = vmatprep.subr.mxu0 0.0
        %551 = vmatpush1.msra.mxu0 1.0
        %552 = vmatprep.subr.mxu0 0.0
        %553 = vmatpush1.msra.mxu0 1.0
        %554 = vmatprep.subr.mxu0 0.0
        %555 = vmatpush1.msra.mxu0 1.0
        %556 = vmatprep.subr.mxu0 0.0
        %557 = vmatpush1.msra.mxu0 1.0
        %558 = vmatprep.subr.mxu0 0.0
        %559 = vmatpush1.msra.mxu0 1.0
        %560 = vmatprep.subr.mxu0 0.0
        %561 = vmatpush1.msra.mxu0 1.0
        %562 = vmatprep.subr.mxu0 0.0
        %563 = vmatpush1.msra.mxu0 1.0
        %564 = vmatprep.subr.mxu0 0.0
        %565 = vmatpush1.msra.mxu0 1.0
        %566 = vmatprep.subr.mxu0 0.0
        %567 = vmatpush1.msra.mxu0 1.0
        %568 = vmatprep.subr.mxu0 0.0
        %569 = vmatpush1.msra.mxu0 1.0
        %570 = vmatprep.subr.mxu0 0.0
        %571 = vmatpush1.msra.mxu0 0.0
        %572 = vmatprep.subr.mxu0 0.0
        %573 = vmatpush1.msra.mxu0 0.0
        %574 = vmatprep.subr.mxu0 0.0
        %575 = vmatpush1.msra.mxu0 0.0
        %576 = vmatprep.subr.mxu0 0.0
        %577 = vmatpush1.msra.mxu0 0.0
        %578 = vmatprep.subr.mxu0 0.0
        %579 = vmatpush1.msra.mxu0 0.0
        %580 = vmatprep.subr.mxu0 0.0
        %581 = vmatpush1.msra.mxu0 0.0
        %582 = vmatprep.subr.mxu0 0.0
        %583 = vmatpush1.msra.mxu0 0.0
        %584 = vmatprep.subr.mxu0 0.0
        %585 = vmatpush1.msra.mxu0 0.0
        %586 = vmatprep.subr.mxu0 0.0
        %587 = vmatpush1.msra.mxu0 0.0
        %588 = vmatprep.subr.mxu0 0.0
        %589 = vmatpush1.msra.mxu0 0.0
        %590 = vmatprep.subr.mxu0 0.0
        %591 = vmatpush1.msra.mxu0 0.0
        %592 = vmatprep.subr.mxu0 0.0
        %593 = vmatpush1.msra.mxu0 0.0
        %594 = vmatprep.subr.mxu0 0.0
        %595 = vmatpush1.msra.mxu0 0.0
        %596 = vmatprep.subr.mxu0 0.0
        %597 = vmatpush1.msra.mxu0 0.0
        %598 = vmatprep.subr.mxu0 0.0
        %599 = vmatpush1.msra.mxu0 0.0
        %600 = vmatprep.subr.mxu0 0.0
        %601 = vmatpush1.msra.mxu0 0.0
        %602 = vmatprep.mubr.f32.mxu0 0.0
        %603 = vmatmul.mubr.f32.gmra.mrb[0].mxu0 %v536
        %v604 = vpop.f32.mrb[0].mxu0
        %v605 = vadd.f32 0.0, %v604
        %v606 = vpop.f32.mrb[0].mxu0
        %607 = vmatprep.mubr.f32.mxu0 0.0
        %608 = vmatmul.mubr.f32.gmra.mrb[0].mxu0 %v537
        %v609 = vpop.f32.mrb[0].mxu0
        %v610 = vadd.f32 0.0, %v609
        %v611 = vpop.f32.mrb[0].mxu0
        %612 = vdwg.mxu0
        %v613 = vmul.f32 %v299, %v303
        %v614 = vmul.f32 %v300, %v304
        %615 = vmatprep.subr.mxu0 0.0
        %616 = vmatpush1.msra.mxu0 1.0
        %617 = vmatprep.subr.mxu0 0.0
        %618 = vmatpush1.msra.mxu0 1.0
        %619 = vmatprep.subr.mxu0 0.0
        %620 = vmatpush1.msra.mxu0 1.0
        %621 = vmatprep.subr.mxu0 0.0
        %622 = vmatpush1.msra.mxu0 1.0
        %623 = vmatprep.subr.mxu0 0.0
        %624 = vmatpush1.msra.mxu0 1.0
        %625 = vmatprep.subr.mxu0 0.0
        %626 = vmatpush1.msra.mxu0 1.0
        %627 = vmatprep.subr.mxu0 0.0
        %628 = vmatpush1.msra.mxu0 1.0
        %629 = vmatprep.subr.mxu0 0.0
        %630 = vmatpush1.msra.mxu0 1.0
        %631 = vmatprep.subr.mxu0 0.0
        %632 = vmatpush1.msra.mxu0 1.0
        %633 = vmatprep.subr.mxu0 0.0
        %634 = vmatpush1.msra.mxu0 1.0
        %635 = vmatprep.subr.mxu0 0.0
        %636 = vmatpush1.msra.mxu0 1.0
        %637 = vmatprep.subr.mxu0 0.0
        %638 = vmatpush1.msra.mxu0 1.0
        %639 = vmatprep.subr.mxu0 0.0
        %640 = vmatpush1.msra.mxu0 1.0
        %641 = vmatprep.subr.mxu0 0.0
        %642 = vmatpush1.msra.mxu0 1.0
        %643 = vmatprep.subr.mxu0 0.0
        %644 = vmatpush1.msra.mxu0 1.0
        %645 = vmatprep.subr.mxu0 0.0
        %646 = vmatpush1.msra.mxu0 1.0
        %647 = vmatprep.subr.mxu0 0.0
        %648 = vmatpush1.msra.mxu0 0.0
        %649 = vmatprep.subr.mxu0 0.0
        %650 = vmatpush1.msra.mxu0 0.0
        %651 = vmatprep.subr.mxu0 0.0
        %652 = vmatpush1.msra.mxu0 0.0
        %653 = vmatprep.subr.mxu0 0.0
        %654 = vmatpush1.msra.mxu0 0.0
        %655 = vmatprep.subr.mxu0 0.0
        %656 = vmatpush1.msra.mxu0 0.0
        %657 = vmatprep.subr.mxu0 0.0
        %658 = vmatpush1.msra.mxu0 0.0
        %659 = vmatprep.subr.mxu0 0.0
        %660 = vmatpush1.msra.mxu0 0.0
        %661 = vmatprep.subr.mxu0 0.0
        %662 = vmatpush1.msra.mxu0 0.0
        %663 = vmatprep.subr.mxu0 0.0
        %664 = vmatpush1.msra.mxu0 0.0
        %665 = vmatprep.subr.mxu0 0.0
        %666 = vmatpush1.msra.mxu0 0.0
        %667 = vmatprep.subr.mxu0 0.0
        %668 = vmatpush1.msra.mxu0 0.0
        %669 = vmatprep.subr.mxu0 0.0
        %670 = vmatpush1.msra.mxu0 0.0
        %671 = vmatprep.subr.mxu0 0.0
        %672 = vmatpush1.msra.mxu0 0.0
        %673 = vmatprep.subr.mxu0 0.0
        %674 = vmatpush1.msra.mxu0 0.0
        %675 = vmatprep.subr.mxu0 0.0
        %676 = vmatpush1.msra.mxu0 0.0
        %677 = vmatprep.subr.mxu0 0.0
        %678 = vmatpush1.msra.mxu0 0.0
        %679 = vmatprep.mubr.f32.mxu0 0.0
        %680 = vmatmul.mubr.f32.gmra.mrb[0].mxu0 %v613
        %v681 = vpop.f32.mrb[0].mxu0
        %v682 = vadd.f32 0.0, %v681
        %v683 = vpop.f32.mrb[0].mxu0
        %684 = vmatprep.mubr.f32.mxu0 0.0
        %685 = vmatmul.mubr.f32.gmra.mrb[0].mxu0 %v614
        %v686 = vpop.f32.mrb[0].mxu0
        %v687 = vadd.f32 0.0, %v686
        %v688 = vpop.f32.mrb[0].mxu0
        %689 = vdwg.mxu0
        %v690 = vmul.f32 %v374, %v451
        %v691 = vmul.f32 %v379, %v456
        %v692 = vmax.f32 %v690, 1e-16
        %v693 = vmax.f32 %v691, 1e-16
        %v694 = vrsqrt.pop %v692
        %v695 = vrsqrt.pop %v693
        %v696 = vmul.f32 %v605, %v694
        %v697 = vmul.f32 %v610, %v695
        %v698 = vmul.f32 %v374, %v528
        %v699 = vmul.f32 %v379, %v533
        %v700 = vmax.f32 %v698, 1e-16
        %v701 = vmax.f32 %v699, 1e-16
        %v702 = vrsqrt.pop %v700
        %v703 = vrsqrt.pop %v701
        %v704 = vmul.f32 %v682, %v702
        %v705 = vmul.f32 %v687, %v703
        %v706 = vsub.f32 0.5, %v696
        %v707 = vsub.f32 0.5, %v697
        %v708 = vadd.f32 %v706, %v704
        %v709 = vadd.f32 %v707, %v705
        %v710 = vmax.f32 %v708, 0.0
        %v711 = vmax.f32 %v709, 0.0
        %v712 = vlaneseq
        %v713 = vshrl.u32 %v712, 7
        %v714 = vadd.s32 %v713, 8
        %v715 = vstv %s298
        %v716 = vadd.s32 %v715, %v713
        %v717 = vadd.s32 %v715, %v714
        %vm718 = vcmp.lt.s32.totalorder %v716, 24
        %vm719 = vcmp.lt.s32.totalorder %v717, 24
        %v720 = vsel %vm718, %v710, 0.0
        %v721 = vsel %vm719, %v711, 0.0
        %vm722 = vcmask 7168
        %v723 = vsel %vm722, %v720, 0.0
        %v724 = vsel %vm722, %v721, 0.0
        %v725 = vadd.f32 %v723, %v724
        %v726 = vrot.slane %v725, 4
        %v727 = vadd.f32 %v725, %v726
        %v728 = vrot.slane %v727, 2
        %v729 = vadd.f32 %v727, %v728
        %v730 = vrot.slane %v729, 1
        %v731 = vadd.f32 %v729, %v730
        %733 = vset.pattern.permute.xlu0 0
        %734 = vperm.xlu0 %733, %v731
        %v735 = vpop.permute.xlu0 %734
        %737 = vst [vmem:[%s282] sm:$0x1] %v735
        %s738 = sand.u32 %s109, 1
        %s739 = scalar_lea.sflag [#allocation4], %s738
        %s740 = sand.u32 %s109, 1
        %s741 = scalar_lea.vmem [#allocation8], %s740
        // Predicated region
        $region45: #{tpu_custom_call.1} parent=31 // pred_check
          %p742 = pneg %p119
        $region46: #{tpu_custom_call.1} parent=31 // pred_check_branch
          %744 = sbr.rel (%p742) target = $region48
        $region47: #{tpu_custom_call.1} parent=31 // pred_region
          %s746 = ssub.s32 16, 16
          %747 = vsyncadd %s739, %s746
          %s748 = smul.addr %s23, 16
          %s749 = scalar_lea.hbm %s3, %s748
          %s751 = sshll.u32 %s741, 4
          %s752 = int_to_ptr.vmem [resolvable:$true] %s751
          %754 = dma.vmem_to_hbm [thread:$0]  %s752, 16, %s749, %s739
        $region48: #{tpu_custom_call.1} parent=31 // pred_fallthru
          _
      $region32: #{tpu_custom_call.1} parent=5 // pred_fallthru
        _
      %p755 = scmp.le.s32.totalorder 2, %s18
      // Predicated region
      $region49: #{tpu_custom_call.1} parent=5 // pred_check
        %p756 = pneg %p755
      $region50: #{tpu_custom_call.1} parent=5 // pred_check_branch
        %758 = sbr.rel (%p756) target = $region52
      $region51: #{tpu_custom_call.1} parent=5 // pred_region
        %s759 = ssub.s32 %s18, 2
        // Predicated region
        $region53: #{tpu_custom_call.1} parent=51 // pred_check
          %p760 = pneg %p125
        $region54: #{tpu_custom_call.1} parent=51 // pred_check_branch
          %762 = sbr.rel (%p760) target = $region56
        $region55: #{tpu_custom_call.1} parent=51 // pred_region
          %s763 = sand.u32 %s110, 1
          %s764 = scalar_lea.sflag [#allocation4], %s763
          %s765 = sand.u32 %s110, 1
          %s766 = scalar_lea.vmem [#allocation8], %s765
          %767 = dma.done %s764, 16
        $region56: #{tpu_custom_call.1} parent=51 // pred_fallthru
          _
      $region52: #{tpu_custom_call.1} parent=5 // pred_fallthru
        _
    $region6: #{tpu_custom_call.1} parent=1 // loop_footer
      %s22 = sadd.s32 1, %s18
    $region7: #{tpu_custom_call.1} parent=1 // loop_footer_branch
      %17 = sbr.rel target = $region3
    $region8: #{tpu_custom_call.1} parent=1 // loop_exit
      _
    %768 = vsyncpa [#allocation3], 1
    %s769 = scalar_lea.sflag [#allocation3], 1
    %770 = vsyncpa %s769, 1
    %771 = vsyncpa [#allocation6], 1
    %s772 = scalar_lea.sflag [#allocation6], 1
    %773 = vsyncpa %s772, 1
    %774 = vsyncpa [#allocation4], 1
    %s775 = scalar_lea.sflag [#allocation4], 1
    %776 = vsyncpa %s775, 1

</llo_original>
